<compile_context>
chip_gen: v6e
topology: v6e:2x2x1
jax: 0.10.0
libtpu: 0.0.40
codegen_flags: <defaults>
</compile_context>

<pallas_src>
import functools

import jax
import jax.numpy as jnp
from jax import lax
from jax.experimental import pallas as pl
from jax.experimental.pallas import tpu as pltpu


def _round_up(v, m):
    return -(-v // m) * m


def _shift_lanes(a, s):
    """Return b with b[:, p] = a[:, p + s] for in-range p; shifted-in lanes are 0.

    Implemented with static lane slices + zero fill (sign-unambiguous); the
    out-of-image / cross-image positions are fully re-masked by the caller.
    """
    if s == 0:
        return a
    c, n = a.shape
    z = jnp.zeros((c, abs(s)), a.dtype)
    if s > 0:
        return jnp.concatenate([a[:, s:], z], axis=1)
    return jnp.concatenate([z, a[:, : n + s]], axis=1)


def _basic_block_kernel(x_ref, w1_ref, w2_ref, out_ref, *, N, H, W, C_IN, K1, K2):
    """Fused Conv3x3+ReLU -> Conv3x3+ReLU over the whole (small) batch.

    x_ref  : (N*C_IN,  H*W)   NCHW input, N folded into the sublane axis
    w1_ref : (HID,   K1)      conv1 weights, taps stacked along K; bias column
    w2_ref : (C_OUT, K2)      conv2 weights, taps stacked along K; bias column
    out_ref: (N*C_OUT, H*W)   dense NCHW-flat output slab
    """
    HW = H * W
    NHW = N * HW

    # Static per-tap validity masks, shape (1, N*HW), broadcast over channels.
    # p_local is the flat pixel index inside each image (period HW); invalid
    # positions cover both SAME-padding borders and cross-image bleed.
    pos = lax.broadcasted_iota(jnp.int32, (1, NHW), 1)
    p_local = pos % HW
    col = p_local % W
    row_ok = {0: p_local >= W, 1: None, 2: p_local < HW - W}
    col_ok = {0: col >= 1, 1: None, 2: col <= W - 2}

    def conv3x3_relu(a, w_stacked, k_total):
        """a: (C, N*HW) activation; w_stacked: (O, k_total).  Returns (O, N*HW)."""
        c = a.shape[0]
        pieces = []
        for kh in range(3):
            for kw in range(3):
                s = (kh - 1) * W + (kw - 1)          # static flat tap offset
                patch = _shift_lanes(a, s)            # (c, N*HW)
                rm, cm = row_ok[kh], col_ok[kw]
                mask = rm if cm is None else (cm if rm is None else rm & cm)
                if mask is not None:
                    patch = jnp.where(mask, patch, 0.0)
                pieces.append(patch)
        # Bias row (constant 1.0) plus zero rows padding K to a multiple of 8.
        pad_rows = k_total - 9 * c
        extra = (lax.broadcasted_iota(jnp.int32, (pad_rows, NHW), 0) == 0)
        pieces.append(extra.astype(jnp.float32))
        operand = jnp.concatenate(pieces, axis=0)     # (k_total, N*HW), registers
        acc = jnp.dot(w_stacked, operand, preferred_element_type=jnp.float32)
        return jnp.maximum(acc, 0.0)

    # (N*C_IN, HW) -> (C_IN, N*HW): put the two images side by side on lanes.
    a0 = jnp.concatenate(
        [x_ref[n * C_IN:(n + 1) * C_IN, :] for n in range(N)], axis=1
    ).astype(jnp.float32)

    h = conv3x3_relu(a0, w1_ref[...], K1)             # (HID,   N*HW)
    y = conv3x3_relu(h, w2_ref[...], K2)              # (C_OUT, N*HW)

    # (C_OUT, N*HW) -> (N*C_OUT, HW): one dense store of the full output slab.
    out_ref[...] = jnp.concatenate(
        [y[:, n * HW:(n + 1) * HW] for n in range(N)], axis=0
    ).astype(out_ref.dtype)


def _stack_conv_weights(w, b, k_total):
    """(O, I, 3, 3) OIHW weights + (O,) bias -> (O, k_total) stacked matrix.

    Column t*I + i (t = kh*3 + kw) holds w[:, i, kh, kw]; column 9*I holds the
    bias (matched by the constant-1.0 operand row); remaining columns are zero
    padding up to the 8-aligned K.
    """
    o, i = w.shape[0], w.shape[1]
    wt = jnp.transpose(w, (0, 2, 3, 1)).reshape(o, 9 * i)
    pad = k_total - 9 * i - 1
    return jnp.concatenate(
        [wt, b.reshape(o, 1), jnp.zeros((o, pad), w.dtype)], axis=1)


def basic_block_forward(x_nchw, w1, b1, w2, b2):
    """x_nchw: (N, C_in, H, W) f32.  Weights/biases in PyTorch OIHW / (O,) layout.

    Returns (N, C_out, H, W), matching BasicBlock.forward.
    """
    N, C_IN, H, W = x_nchw.shape
    HID = w1.shape[0]
    C_OUT = w2.shape[0]
    HW = H * W

    K1 = _round_up(9 * C_IN + 1, 8)
    K2 = _round_up(9 * HID + 1, 8)

    # Tiny parameter prep (hoisted/cached in a real model).  The activation is
    # only reshaped -- contiguous NCHW -> (N*C, H*W) is free, no transpose/pad.
    w1s = _stack_conv_weights(w1.astype(jnp.float32), b1.astype(jnp.float32), K1)
    w2s = _stack_conv_weights(w2.astype(jnp.float32), b2.astype(jnp.float32), K2)
    x_flat = x_nchw.reshape(N * C_IN, HW)

    kernel = functools.partial(
        _basic_block_kernel, N=N, H=H, W=W, C_IN=C_IN, K1=K1, K2=K2)

    flops = 2 * 9 * (C_IN * HID + HID * C_OUT) * N * HW
    bytes_accessed = 4 * (x_flat.size + N * C_OUT * HW + w1s.size + w2s.size)

    out_flat = pl.pallas_call(
        kernel,
        out_shape=jax.ShapeDtypeStruct((N * C_OUT, HW), jnp.float32),
        grid_spec=pltpu.PrefetchScalarGridSpec(
            num_scalar_prefetch=0,
            grid=(1,),  # whole batch in one step; no per-step pipeline overhead
            in_specs=[
                pl.BlockSpec((N * C_IN, HW), lambda i: (0, 0)),
                pl.BlockSpec((HID, K1), lambda i: (0, 0)),
                pl.BlockSpec((C_OUT, K2), lambda i: (0, 0)),
            ],
            out_specs=pl.BlockSpec((N * C_OUT, HW), lambda i: (0, 0)),
        ),
        compiler_params=pltpu.CompilerParams(
            dimension_semantics=("arbitrary",)),
        cost_estimate=pl.CostEstimate(
            flops=flops, transcendentals=0, bytes_accessed=bytes_accessed),
    )(x_flat, w1s, w2s)

    # Free reshape back to NCHW (same memory layout).
    return out_flat.reshape(N, C_OUT, H, W)


def _reference_forward(x, w1, b1, w2, b2):
    """Pure-JAX reference (NCHW activations, OIHW weights)."""
    dn1 = lax.conv_dimension_numbers(x.shape, w1.shape, ("NCHW", "OIHW", "NCHW"))
    h = lax.conv_general_dilated(x, w1, (1, 1), ((1, 1), (1, 1)),
                                 dimension_numbers=dn1)
    h = jnp.maximum(h + b1.reshape(1, -1, 1, 1), 0.0)
    dn2 = lax.conv_dimension_numbers(h.shape, w2.shape, ("NCHW", "OIHW", "NCHW"))
    y = lax.conv_general_dilated(h, w2, (1, 1), ((1, 1), (1, 1)),
                                 dimension_numbers=dn2)
    return jnp.maximum(y + b2.reshape(1, -1, 1, 1), 0.0)


if __name__ == "__main__":
    # BasicBlock(in_channels=4, out_channels=4, hidden_dim=8)
    N, C_IN, H, W = 2, 4, 16, 16
    HID, C_OUT = 8, 4

    key = jax.random.PRNGKey(0)
    kx, k1, k2, k3, k4 = jax.random.split(key, 5)

    x = jax.random.normal(kx, (N, C_IN, H, W), dtype=jnp.float32)
    # PyTorch Conv2d parameter layout: weight (out, in, kh, kw), bias (out,).
    w1 = jax.random.normal(k1, (HID, C_IN, 3, 3), dtype=jnp.float32) * 0.1
    b1 = jax.random.normal(k2, (HID,), dtype=jnp.float32) * 0.05
    w2 = jax.random.normal(k3, (C_OUT, HID, 3, 3), dtype=jnp.float32) * 0.1
    b2 = jax.random.normal(k4, (C_OUT,), dtype=jnp.float32) * 0.05

    out = jax.block_until_ready(basic_block_forward(x, w1, b1, w2, b2))
    ref = jax.block_until_ready(_reference_forward(x, w1, b1, w2, b2))

    assert out.shape == (N, C_OUT, H, W)
    assert jnp.allclose(out, ref, atol=1e-4, rtol=1e-4), "mismatch vs reference"
    print("KERNEL_OK")
</pallas_src>

<mosaic_0001>
module attributes {stable_mosaic.version = 11 : i64} {
  func.func @_basic_block_kernel(%arg0: i32, %arg1: memref<8x256xf32, #tpu.memory_space<vmem>>, %arg2: memref<8x40xf32, #tpu.memory_space<vmem>>, %arg3: memref<4x80xf32, #tpu.memory_space<vmem>>, %arg4: memref<8x256xf32, #tpu.memory_space<vmem>>) attributes {dimension_semantics = [#tpu.dimension_semantics<arbitrary>], iteration_bounds = array<i64: 1>, scalar_prefetch = 0 : i64, scratch_operands = 0 : i64, tpu.core_type = #tpu.core_type<tc>, window_params = [{pipeline_mode = #tpu.pipeline_mode<synchronous>, transform_indices = @transform_0, window_bounds = array<i64: 8, 256>}, {pipeline_mode = #tpu.pipeline_mode<synchronous>, transform_indices = @transform_1, window_bounds = array<i64: 8, 40>}, {pipeline_mode = #tpu.pipeline_mode<synchronous>, transform_indices = @transform_2, window_bounds = array<i64: 4, 80>}, {pipeline_mode = #tpu.pipeline_mode<synchronous>, transform_indices = @transform_3, window_bounds = array<i64: 8, 256>}]} {
    %0 = tpu.iota {dimensions = array<i32: 1>} : vector<1x512xi32>
    %c256_i32 = arith.constant 256 : i32
    %c0_i32 = arith.constant 0 : i32
    %1 = arith.cmpi eq, %c256_i32, %c0_i32 : i32
    %c1_i32 = arith.constant 1 : i32
    %2 = arith.select %1, %c1_i32, %c256_i32 : i32
    %3 = vector.broadcast %2 : i32 to vector<1x512xi32>
    %4 = arith.remsi %0, %3 : vector<1x512xi32>
    %c0_i32_0 = arith.constant 0 : i32
    %5 = vector.broadcast %c0_i32_0 : i32 to vector<1x512xi32>
    %6 = arith.cmpi ne, %4, %5 : vector<1x512xi32>
    %c0_i32_1 = arith.constant 0 : i32
    %7 = vector.broadcast %c0_i32_1 : i32 to vector<1x512xi32>
    %8 = arith.cmpi slt, %4, %7 : vector<1x512xi32>
    %c0_i32_2 = arith.constant 0 : i32
    %9 = arith.cmpi slt, %2, %c0_i32_2 : i32
    %10 = vector.broadcast %9 : i1 to vector<1x512xi1>
    %11 = vector.broadcast %10 : vector<1x512xi1> to vector<1x512xi1>
    %12 = arith.xori %8, %11 : vector<1x512xi1>
    %13 = arith.andi %12, %6 : vector<1x512xi1>
    %14 = vector.broadcast %2 : i32 to vector<1x512xi32>
    %15 = arith.addi %4, %14 : vector<1x512xi32>
    %16 = arith.select %13, %15, %4 : vector<1x512xi1>, vector<1x512xi32>
    %c16_i32 = arith.constant 16 : i32
    %c0_i32_3 = arith.constant 0 : i32
    %17 = arith.cmpi eq, %c16_i32, %c0_i32_3 : i32
    %c1_i32_4 = arith.constant 1 : i32
    %18 = arith.select %17, %c1_i32_4, %c16_i32 : i32
    %19 = vector.broadcast %18 : i32 to vector<1x512xi32>
    %20 = arith.remsi %16, %19 : vector<1x512xi32>
    %c0_i32_5 = arith.constant 0 : i32
    %21 = vector.broadcast %c0_i32_5 : i32 to vector<1x512xi32>
    %22 = arith.cmpi ne, %20, %21 : vector<1x512xi32>
    %c0_i32_6 = arith.constant 0 : i32
    %23 = vector.broadcast %c0_i32_6 : i32 to vector<1x512xi32>
    %24 = arith.cmpi slt, %20, %23 : vector<1x512xi32>
    %c0_i32_7 = arith.constant 0 : i32
    %25 = arith.cmpi slt, %18, %c0_i32_7 : i32
    %26 = vector.broadcast %25 : i1 to vector<1x512xi1>
    %27 = vector.broadcast %26 : vector<1x512xi1> to vector<1x512xi1>
    %28 = arith.xori %24, %27 : vector<1x512xi1>
    %29 = arith.andi %28, %22 : vector<1x512xi1>
    %30 = vector.broadcast %18 : i32 to vector<1x512xi32>
    %31 = arith.addi %20, %30 : vector<1x512xi32>
    %32 = arith.select %29, %31, %20 : vector<1x512xi1>, vector<1x512xi32>
    %c16_i32_8 = arith.constant 16 : i32
    %33 = vector.broadcast %c16_i32_8 : i32 to vector<1x512xi32>
    %34 = arith.cmpi sge, %16, %33 : vector<1x512xi32>
    %c240_i32 = arith.constant 240 : i32
    %35 = vector.broadcast %c240_i32 : i32 to vector<1x512xi32>
    %36 = arith.cmpi slt, %16, %35 : vector<1x512xi32>
    %c1_i32_9 = arith.constant 1 : i32
    %37 = vector.broadcast %c1_i32_9 : i32 to vector<1x512xi32>
    %38 = arith.cmpi sge, %32, %37 : vector<1x512xi32>
    %c14_i32 = arith.constant 14 : i32
    %39 = vector.broadcast %c14_i32 : i32 to vector<1x512xi32>
    %40 = arith.cmpi sle, %32, %39 : vector<1x512xi32>
    %c0 = arith.constant 0 : index
    %c0_10 = arith.constant 0 : index
    %41 = vector.load %arg1[%c0, %c0_10] : memref<8x256xf32, #tpu.memory_space<vmem>>, vector<4x256xf32>
    %c4 = arith.constant 4 : index
    %c0_11 = arith.constant 0 : index
    %42 = vector.load %arg1[%c4, %c0_11] : memref<8x256xf32, #tpu.memory_space<vmem>>, vector<4x256xf32>
    %43 = tpu.concatenate %41, %42 in 1 : vector<4x256xf32>, vector<4x256xf32> -> vector<4x512xf32>
    %c0_12 = arith.constant 0 : index
    %c0_13 = arith.constant 0 : index
    %44 = vector.load %arg2[%c0_12, %c0_13] : memref<8x40xf32, #tpu.memory_space<vmem>>, vector<8x40xf32>
    %cst = arith.constant 0.000000e+00 : f32
    %45 = vector.broadcast %cst : f32 to vector<4x17xf32>
    %46 = vector.extract_strided_slice %43 {offsets = [0, 0], sizes = [4, 495], strides = [1, 1]} : vector<4x512xf32> to vector<4x495xf32>
    %47 = tpu.concatenate %45, %46 in 1 : vector<4x17xf32>, vector<4x495xf32> -> vector<4x512xf32>
    %48 = arith.andi %34, %38 : vector<1x512xi1>
    %cst_14 = arith.constant 0.000000e+00 : f32
    %49 = vector.shape_cast %48 : vector<1x512xi1> to vector<1x512xi1>
    %50 = vector.broadcast %49 : vector<1x512xi1> to vector<4x512xi1>
    %51 = vector.broadcast %cst_14 : f32 to vector<4x512xf32>
    %52 = arith.select %50, %47, %51 : vector<4x512xi1>, vector<4x512xf32>
    %cst_15 = arith.constant 0.000000e+00 : f32
    %53 = vector.broadcast %cst_15 : f32 to vector<4x16xf32>
    %54 = vector.extract_strided_slice %43 {offsets = [0, 0], sizes = [4, 496], strides = [1, 1]} : vector<4x512xf32> to vector<4x496xf32>
    %55 = tpu.concatenate %53, %54 in 1 : vector<4x16xf32>, vector<4x496xf32> -> vector<4x512xf32>
    %cst_16 = arith.constant 0.000000e+00 : f32
    %56 = vector.shape_cast %34 : vector<1x512xi1> to vector<1x512xi1>
    %57 = vector.broadcast %56 : vector<1x512xi1> to vector<4x512xi1>
    %58 = vector.broadcast %cst_16 : f32 to vector<4x512xf32>
    %59 = arith.select %57, %55, %58 : vector<4x512xi1>, vector<4x512xf32>
    %cst_17 = arith.constant 0.000000e+00 : f32
    %60 = vector.broadcast %cst_17 : f32 to vector<4x15xf32>
    %61 = vector.extract_strided_slice %43 {offsets = [0, 0], sizes = [4, 497], strides = [1, 1]} : vector<4x512xf32> to vector<4x497xf32>
    %62 = tpu.concatenate %60, %61 in 1 : vector<4x15xf32>, vector<4x497xf32> -> vector<4x512xf32>
    %63 = arith.andi %34, %40 : vector<1x512xi1>
    %cst_18 = arith.constant 0.000000e+00 : f32
    %64 = vector.shape_cast %63 : vector<1x512xi1> to vector<1x512xi1>
    %65 = vector.broadcast %64 : vector<1x512xi1> to vector<4x512xi1>
    %66 = vector.broadcast %cst_18 : f32 to vector<4x512xf32>
    %67 = arith.select %65, %62, %66 : vector<4x512xi1>, vector<4x512xf32>
    %cst_19 = arith.constant 0.000000e+00 : f32
    %68 = vector.broadcast %cst_19 : f32 to vector<4x1xf32>
    %69 = vector.extract_strided_slice %43 {offsets = [0, 0], sizes = [4, 511], strides = [1, 1]} : vector<4x512xf32> to vector<4x511xf32>
    %70 = tpu.concatenate %68, %69 in 1 : vector<4x1xf32>, vector<4x511xf32> -> vector<4x512xf32>
    %cst_20 = arith.constant 0.000000e+00 : f32
    %71 = vector.shape_cast %38 : vector<1x512xi1> to vector<1x512xi1>
    %72 = vector.broadcast %71 : vector<1x512xi1> to vector<4x512xi1>
    %73 = vector.broadcast %cst_20 : f32 to vector<4x512xf32>
    %74 = arith.select %72, %70, %73 : vector<4x512xi1>, vector<4x512xf32>
    %cst_21 = arith.constant 0.000000e+00 : f32
    %75 = vector.broadcast %cst_21 : f32 to vector<4x1xf32>
    %76 = vector.extract_strided_slice %43 {offsets = [0, 1], sizes = [4, 511], strides = [1, 1]} : vector<4x512xf32> to vector<4x511xf32>
    %77 = tpu.concatenate %76, %75 in 1 : vector<4x511xf32>, vector<4x1xf32> -> vector<4x512xf32>
    %cst_22 = arith.constant 0.000000e+00 : f32
    %78 = vector.shape_cast %40 : vector<1x512xi1> to vector<1x512xi1>
    %79 = vector.broadcast %78 : vector<1x512xi1> to vector<4x512xi1>
    %80 = vector.broadcast %cst_22 : f32 to vector<4x512xf32>
    %81 = arith.select %79, %77, %80 : vector<4x512xi1>, vector<4x512xf32>
    %cst_23 = arith.constant 0.000000e+00 : f32
    %82 = vector.broadcast %cst_23 : f32 to vector<4x15xf32>
    %83 = vector.extract_strided_slice %43 {offsets = [0, 15], sizes = [4, 497], strides = [1, 1]} : vector<4x512xf32> to vector<4x497xf32>
    %84 = tpu.concatenate %83, %82 in 1 : vector<4x497xf32>, vector<4x15xf32> -> vector<4x512xf32>
    %85 = arith.andi %36, %38 : vector<1x512xi1>
    %cst_24 = arith.constant 0.000000e+00 : f32
    %86 = vector.shape_cast %85 : vector<1x512xi1> to vector<1x512xi1>
    %87 = vector.broadcast %86 : vector<1x512xi1> to vector<4x512xi1>
    %88 = vector.broadcast %cst_24 : f32 to vector<4x512xf32>
    %89 = arith.select %87, %84, %88 : vector<4x512xi1>, vector<4x512xf32>
    %cst_25 = arith.constant 0.000000e+00 : f32
    %90 = vector.broadcast %cst_25 : f32 to vector<4x16xf32>
    %91 = vector.extract_strided_slice %43 {offsets = [0, 16], sizes = [4, 496], strides = [1, 1]} : vector<4x512xf32> to vector<4x496xf32>
    %92 = tpu.concatenate %91, %90 in 1 : vector<4x496xf32>, vector<4x16xf32> -> vector<4x512xf32>
    %cst_26 = arith.constant 0.000000e+00 : f32
    %93 = vector.shape_cast %36 : vector<1x512xi1> to vector<1x512xi1>
    %94 = vector.broadcast %93 : vector<1x512xi1> to vector<4x512xi1>
    %95 = vector.broadcast %cst_26 : f32 to vector<4x512xf32>
    %96 = arith.select %94, %92, %95 : vector<4x512xi1>, vector<4x512xf32>
    %cst_27 = arith.constant 0.000000e+00 : f32
    %97 = vector.broadcast %cst_27 : f32 to vector<4x17xf32>
    %98 = vector.extract_strided_slice %43 {offsets = [0, 17], sizes = [4, 495], strides = [1, 1]} : vector<4x512xf32> to vector<4x495xf32>
    %99 = tpu.concatenate %98, %97 in 1 : vector<4x495xf32>, vector<4x17xf32> -> vector<4x512xf32>
    %100 = arith.andi %36, %40 : vector<1x512xi1>
    %cst_28 = arith.constant 0.000000e+00 : f32
    %101 = vector.shape_cast %100 : vector<1x512xi1> to vector<1x512xi1>
    %102 = vector.broadcast %101 : vector<1x512xi1> to vector<4x512xi1>
    %103 = vector.broadcast %cst_28 : f32 to vector<4x512xf32>
    %104 = arith.select %102, %99, %103 : vector<4x512xi1>, vector<4x512xf32>
    %105 = tpu.iota {dimensions = array<i32: 0>} : vector<4x512xi32>
    %c0_i32_29 = arith.constant 0 : i32
    %106 = vector.broadcast %c0_i32_29 : i32 to vector<4x512xi32>
    %107 = arith.cmpi eq, %105, %106 : vector<4x512xi32>
    %108 = arith.extui %107 : vector<4x512xi1> to vector<4x512xi32>
    %109 = arith.sitofp %108 : vector<4x512xi32> to vector<4x512xf32>
    %110 = tpu.concatenate %52, %59, %67, %74, %43, %81, %89, %96, %104, %109 in 0 : vector<4x512xf32>, vector<4x512xf32>, vector<4x512xf32>, vector<4x512xf32>, vector<4x512xf32>, vector<4x512xf32>, vector<4x512xf32>, vector<4x512xf32>, vector<4x512xf32>, vector<4x512xf32> -> vector<40x512xf32>
    %cst_30 = arith.constant dense<0.000000e+00> : vector<8x512xf32>
    %111 = tpu.matmul %44, %110, %cst_30 {dimension_numbers = #tpu.dot_dimension_numbers<[1], [0], [0], [1], [0, 0, 1, 1], [], []>} : vector<8x40xf32>, vector<40x512xf32>, vector<8x512xf32> -> vector<8x512xf32>
    %cst_31 = arith.constant 0.000000e+00 : f32
    %112 = vector.broadcast %cst_31 : f32 to vector<8x512xf32>
    %113 = arith.maximumf %111, %112 : vector<8x512xf32>
    %c0_32 = arith.constant 0 : index
    %c0_33 = arith.constant 0 : index
    %114 = vector.load %arg3[%c0_32, %c0_33] : memref<4x80xf32, #tpu.memory_space<vmem>>, vector<4x80xf32>
    %cst_34 = arith.constant 0.000000e+00 : f32
    %115 = vector.broadcast %cst_34 : f32 to vector<8x17xf32>
    %116 = vector.extract_strided_slice %113 {offsets = [0, 0], sizes = [8, 495], strides = [1, 1]} : vector<8x512xf32> to vector<8x495xf32>
    %117 = tpu.concatenate %115, %116 in 1 : vector<8x17xf32>, vector<8x495xf32> -> vector<8x512xf32>
    %118 = arith.andi %34, %38 : vector<1x512xi1>
    %cst_35 = arith.constant 0.000000e+00 : f32
    %119 = vector.shape_cast %118 : vector<1x512xi1> to vector<1x512xi1>
    %120 = vector.broadcast %119 : vector<1x512xi1> to vector<8x512xi1>
    %121 = vector.broadcast %cst_35 : f32 to vector<8x512xf32>
    %122 = arith.select %120, %117, %121 : vector<8x512xi1>, vector<8x512xf32>
    %cst_36 = arith.constant 0.000000e+00 : f32
    %123 = vector.broadcast %cst_36 : f32 to vector<8x16xf32>
    %124 = vector.extract_strided_slice %113 {offsets = [0, 0], sizes = [8, 496], strides = [1, 1]} : vector<8x512xf32> to vector<8x496xf32>
    %125 = tpu.concatenate %123, %124 in 1 : vector<8x16xf32>, vector<8x496xf32> -> vector<8x512xf32>
    %cst_37 = arith.constant 0.000000e+00 : f32
    %126 = vector.shape_cast %34 : vector<1x512xi1> to vector<1x512xi1>
    %127 = vector.broadcast %126 : vector<1x512xi1> to vector<8x512xi1>
    %128 = vector.broadcast %cst_37 : f32 to vector<8x512xf32>
    %129 = arith.select %127, %125, %128 : vector<8x512xi1>, vector<8x512xf32>
    %cst_38 = arith.constant 0.000000e+00 : f32
    %130 = vector.broadcast %cst_38 : f32 to vector<8x15xf32>
    %131 = vector.extract_strided_slice %113 {offsets = [0, 0], sizes = [8, 497], strides = [1, 1]} : vector<8x512xf32> to vector<8x497xf32>
    %132 = tpu.concatenate %130, %131 in 1 : vector<8x15xf32>, vector<8x497xf32> -> vector<8x512xf32>
    %133 = arith.andi %34, %40 : vector<1x512xi1>
    %cst_39 = arith.constant 0.000000e+00 : f32
    %134 = vector.shape_cast %133 : vector<1x512xi1> to vector<1x512xi1>
    %135 = vector.broadcast %134 : vector<1x512xi1> to vector<8x512xi1>
    %136 = vector.broadcast %cst_39 : f32 to vector<8x512xf32>
    %137 = arith.select %135, %132, %136 : vector<8x512xi1>, vector<8x512xf32>
    %cst_40 = arith.constant 0.000000e+00 : f32
    %138 = vector.broadcast %cst_40 : f32 to vector<8x1xf32>
    %139 = vector.extract_strided_slice %113 {offsets = [0, 0], sizes = [8, 511], strides = [1, 1]} : vector<8x512xf32> to vector<8x511xf32>
    %140 = tpu.concatenate %138, %139 in 1 : vector<8x1xf32>, vector<8x511xf32> -> vector<8x512xf32>
    %cst_41 = arith.constant 0.000000e+00 : f32
    %141 = vector.shape_cast %38 : vector<1x512xi1> to vector<1x512xi1>
    %142 = vector.broadcast %141 : vector<1x512xi1> to vector<8x512xi1>
    %143 = vector.broadcast %cst_41 : f32 to vector<8x512xf32>
    %144 = arith.select %142, %140, %143 : vector<8x512xi1>, vector<8x512xf32>
    %cst_42 = arith.constant 0.000000e+00 : f32
    %145 = vector.broadcast %cst_42 : f32 to vector<8x1xf32>
    %146 = vector.extract_strided_slice %113 {offsets = [0, 1], sizes = [8, 511], strides = [1, 1]} : vector<8x512xf32> to vector<8x511xf32>
    %147 = tpu.concatenate %146, %145 in 1 : vector<8x511xf32>, vector<8x1xf32> -> vector<8x512xf32>
    %cst_43 = arith.constant 0.000000e+00 : f32
    %148 = vector.shape_cast %40 : vector<1x512xi1> to vector<1x512xi1>
    %149 = vector.broadcast %148 : vector<1x512xi1> to vector<8x512xi1>
    %150 = vector.broadcast %cst_43 : f32 to vector<8x512xf32>
    %151 = arith.select %149, %147, %150 : vector<8x512xi1>, vector<8x512xf32>
    %cst_44 = arith.constant 0.000000e+00 : f32
    %152 = vector.broadcast %cst_44 : f32 to vector<8x15xf32>
    %153 = vector.extract_strided_slice %113 {offsets = [0, 15], sizes = [8, 497], strides = [1, 1]} : vector<8x512xf32> to vector<8x497xf32>
    %154 = tpu.concatenate %153, %152 in 1 : vector<8x497xf32>, vector<8x15xf32> -> vector<8x512xf32>
    %155 = arith.andi %36, %38 : vector<1x512xi1>
    %cst_45 = arith.constant 0.000000e+00 : f32
    %156 = vector.shape_cast %155 : vector<1x512xi1> to vector<1x512xi1>
    %157 = vector.broadcast %156 : vector<1x512xi1> to vector<8x512xi1>
    %158 = vector.broadcast %cst_45 : f32 to vector<8x512xf32>
    %159 = arith.select %157, %154, %158 : vector<8x512xi1>, vector<8x512xf32>
    %cst_46 = arith.constant 0.000000e+00 : f32
    %160 = vector.broadcast %cst_46 : f32 to vector<8x16xf32>
    %161 = vector.extract_strided_slice %113 {offsets = [0, 16], sizes = [8, 496], strides = [1, 1]} : vector<8x512xf32> to vector<8x496xf32>
    %162 = tpu.concatenate %161, %160 in 1 : vector<8x496xf32>, vector<8x16xf32> -> vector<8x512xf32>
    %cst_47 = arith.constant 0.000000e+00 : f32
    %163 = vector.shape_cast %36 : vector<1x512xi1> to vector<1x512xi1>
    %164 = vector.broadcast %163 : vector<1x512xi1> to vector<8x512xi1>
    %165 = vector.broadcast %cst_47 : f32 to vector<8x512xf32>
    %166 = arith.select %164, %162, %165 : vector<8x512xi1>, vector<8x512xf32>
    %cst_48 = arith.constant 0.000000e+00 : f32
    %167 = vector.broadcast %cst_48 : f32 to vector<8x17xf32>
    %168 = vector.extract_strided_slice %113 {offsets = [0, 17], sizes = [8, 495], strides = [1, 1]} : vector<8x512xf32> to vector<8x495xf32>
    %169 = tpu.concatenate %168, %167 in 1 : vector<8x495xf32>, vector<8x17xf32> -> vector<8x512xf32>
    %170 = arith.andi %36, %40 : vector<1x512xi1>
    %cst_49 = arith.constant 0.000000e+00 : f32
    %171 = vector.shape_cast %170 : vector<1x512xi1> to vector<1x512xi1>
    %172 = vector.broadcast %171 : vector<1x512xi1> to vector<8x512xi1>
    %173 = vector.broadcast %cst_49 : f32 to vector<8x512xf32>
    %174 = arith.select %172, %169, %173 : vector<8x512xi1>, vector<8x512xf32>
    %175 = tpu.iota {dimensions = array<i32: 0>} : vector<8x512xi32>
    %c0_i32_50 = arith.constant 0 : i32
    %176 = vector.broadcast %c0_i32_50 : i32 to vector<8x512xi32>
    %177 = arith.cmpi eq, %175, %176 : vector<8x512xi32>
    %178 = arith.extui %177 : vector<8x512xi1> to vector<8x512xi32>
    %179 = arith.sitofp %178 : vector<8x512xi32> to vector<8x512xf32>
    %180 = tpu.concatenate %122, %129, %137, %144, %113, %151, %159, %166, %174, %179 in 0 : vector<8x512xf32>, vector<8x512xf32>, vector<8x512xf32>, vector<8x512xf32>, vector<8x512xf32>, vector<8x512xf32>, vector<8x512xf32>, vector<8x512xf32>, vector<8x512xf32>, vector<8x512xf32> -> vector<80x512xf32>
    %cst_51 = arith.constant dense<0.000000e+00> : vector<4x512xf32>
    %181 = tpu.matmul %114, %180, %cst_51 {dimension_numbers = #tpu.dot_dimension_numbers<[1], [0], [0], [1], [0, 0, 1, 1], [], []>} : vector<4x80xf32>, vector<80x512xf32>, vector<4x512xf32> -> vector<4x512xf32>
    %cst_52 = arith.constant 0.000000e+00 : f32
    %182 = vector.broadcast %cst_52 : f32 to vector<4x512xf32>
    %183 = arith.maximumf %181, %182 : vector<4x512xf32>
    %184 = vector.extract_strided_slice %183 {offsets = [0, 0], sizes = [4, 256], strides = [1, 1]} : vector<4x512xf32> to vector<4x256xf32>
    %185 = vector.extract_strided_slice %183 {offsets = [0, 256], sizes = [4, 256], strides = [1, 1]} : vector<4x512xf32> to vector<4x256xf32>
    %186 = tpu.concatenate %184, %185 in 0 : vector<4x256xf32>, vector<4x256xf32> -> vector<8x256xf32>
    %c0_53 = arith.constant 0 : index
    %c0_54 = arith.constant 0 : index
    %187 = vector.load %arg4[%c0_53, %c0_54] : memref<8x256xf32, #tpu.memory_space<vmem>>, vector<8x256xf32>
    tpu.vector_store %arg4[%c0_53, %c0_54], %186 {strides = array<i32>} : memref<8x256xf32, #tpu.memory_space<vmem>>, vector<8x256xf32>,
    return
  }
  func.func @transform_0(%arg0: i32) -> (i32, i32) {
    %c0_i32 = arith.constant 0 : i32
    %c0_i32_0 = arith.constant 0 : i32
    %c0_i32_1 = arith.constant 0 : i32
    return %c0_i32, %c0_i32_0 : i32, i32
  }
  func.func @transform_1(%arg0: i32) -> (i32, i32) {
    %c0_i32 = arith.constant 0 : i32
    %c0_i32_0 = arith.constant 0 : i32
    %c0_i32_1 = arith.constant 0 : i32
    return %c0_i32, %c0_i32_0 : i32, i32
  }
  func.func @transform_2(%arg0: i32) -> (i32, i32) {
    %c0_i32 = arith.constant 0 : i32
    %c0_i32_0 = arith.constant 0 : i32
    %c0_i32_1 = arith.constant 0 : i32
    return %c0_i32, %c0_i32_0 : i32, i32
  }
  func.func @transform_3(%arg0: i32) -> (i32, i32) {
    %c0_i32 = arith.constant 0 : i32
    %c0_i32_0 = arith.constant 0 : i32
    %c0_i32_1 = arith.constant 0 : i32
    return %c0_i32, %c0_i32_0 : i32, i32
  }
}

</mosaic_0001>

<llo_original>
// kernel: tpu_custom_call.1
$region0: #{tpu_custom_call.1}
  #allocation0 [shape = 'u32[]', space=smem, size = 0x4, offset = 0x4, fixed_abs, tag = 'smem constant byte address 0x4 - core index']
  #allocation1 [shape = 'u32[144,128]{1,0:T(1,128)}', space=vmem, size = 0x12000, scoped, tag = 'internal scratch']
  %s0 = inlined_call_operand.hbm [shape: f32[8,256], index: 0, kind: input, shape index: {}]
  %s1 = inlined_call_operand.hbm [shape: f32[8,40], index: 1, kind: input, shape index: {}]
  %s2 = inlined_call_operand.hbm [shape: f32[4,80], index: 2, kind: input, shape index: {}]
  %s3 = inlined_call_operand.hbm [shape: f32[8,256], index: 3, kind: output, shape index: {}]
  %s4 = sld [smem:[#allocation0]]
  $region34: #{tpu_custom_call.1} parent=0
    _
  %s6 = ssub.s32 1, %s4
  %s7 = scalar_select 0, %s6, %s4
  $region1: #{tpu_custom_call.1} parent=0
    #allocation2 [shape = 'u8[8192]{0}', space=vmem, size = 0x2000, scoped, tag = 'input window, operand 0, single buffered']
    #allocation3 [shape = 's32[1]{0}', space=sflag, size = 0x4, scoped, tag = 'scoped memory for tpu_custom_call.1']
    #allocation4 [shape = 's32[1]{0}', space=sflag, size = 0x4, scoped, tag = 'scoped memory for tpu_custom_call.1']
    #allocation5 [shape = 'u8[4096]{0}', space=vmem, size = 0x1000, scoped, tag = 'input window, operand 1, single buffered']
    #allocation6 [shape = 's32[1]{0}', space=sflag, size = 0x4, scoped, tag = 'scoped memory for tpu_custom_call.1']
    #allocation7 [shape = 'u8[2048]{0}', space=vmem, size = 0x800, scoped, tag = 'input window, operand 2, single buffered']
    #allocation8 [shape = 'u8[8192]{0}', space=vmem, size = 0x2000, scoped, tag = 'output window, operand 0, single buffered']
    %8 = vsyncpa [#allocation3], 0
    %9 = vsyncpa [#allocation6], 0
    %10 = vsyncpa [#allocation4], 0
    // Predicated region
    $region2: #{tpu_custom_call.1} parent=1 // pred_check
      _
    $region3: #{tpu_custom_call.1} parent=1 // pred_check_branch
      %12 = sbr.rel (0) target = $region5
    $region4: #{tpu_custom_call.1} parent=1 // pred_region
      %s14 = ssub.s32 256, 256
      %15 = vsyncadd [#allocation3], %s14
      %s17 = sshll.u32 [#allocation2], 4
      %s18 = int_to_ptr.vmem [resolvable:$true] %s17
      %20 = dma.hbm_to_vmem [thread:$0]  %s0, 256, %s18, [#allocation3]
    $region5: #{tpu_custom_call.1} parent=1 // pred_fallthru
      _
    // Predicated region
    $region6: #{tpu_custom_call.1} parent=1 // pred_check
      _
    $region7: #{tpu_custom_call.1} parent=1 // pred_check_branch
      %22 = sbr.rel (0) target = $region9
    $region8: #{tpu_custom_call.1} parent=1 // pred_region
      %s24 = ssub.s32 128, 128
      %25 = vsyncadd [#allocation6], %s24
      %s27 = sshll.u32 [#allocation5], 4
      %s28 = int_to_ptr.vmem [resolvable:$true] %s27
      %30 = dma.hbm_to_vmem [thread:$0]  %s1, 128, %s28, [#allocation6]
    $region9: #{tpu_custom_call.1} parent=1 // pred_fallthru
      _
    // Predicated region
    $region10: #{tpu_custom_call.1} parent=1 // pred_check
      _
    $region11: #{tpu_custom_call.1} parent=1 // pred_check_branch
      %32 = sbr.rel (0) target = $region13
    $region12: #{tpu_custom_call.1} parent=1 // pred_region
      %s34 = ssub.s32 64, 64
      %35 = vsyncadd [#allocation6], %s34
      %s37 = sshll.u32 [#allocation7], 4
      %s38 = int_to_ptr.vmem [resolvable:$true] %s37
      %40 = dma.hbm_to_vmem [thread:$0]  %s2, 64, %s38, [#allocation6]
    $region13: #{tpu_custom_call.1} parent=1 // pred_fallthru
      _
    // Predicated region
    $region14: #{tpu_custom_call.1} parent=1 // pred_check
      _
    $region15: #{tpu_custom_call.1} parent=1 // pred_check_branch
      %42 = sbr.rel (0) target = $region17
    $region16: #{tpu_custom_call.1} parent=1 // pred_region
      %43 = dma.done [#allocation3], 256
    $region17: #{tpu_custom_call.1} parent=1 // pred_fallthru
      _
    // Predicated region
    $region18: #{tpu_custom_call.1} parent=1 // pred_check
      _
    $region19: #{tpu_custom_call.1} parent=1 // pred_check_branch
      %45 = sbr.rel (0) target = $region21
    $region20: #{tpu_custom_call.1} parent=1 // pred_region
      %46 = dma.done [#allocation6], 128
    $region21: #{tpu_custom_call.1} parent=1 // pred_fallthru
      _
    // Predicated region
    $region22: #{tpu_custom_call.1} parent=1 // pred_check
      _
    $region23: #{tpu_custom_call.1} parent=1 // pred_check_branch
      %48 = sbr.rel (0) target = $region25
    $region24: #{tpu_custom_call.1} parent=1 // pred_region
      %49 = dma.done [#allocation6], 64
    $region25: #{tpu_custom_call.1} parent=1 // pred_fallthru
      _
    %v50 = vlaneseq
    %v51 = vand.u32 %v50, 127
    %v52 = vadd.s32 %v51, 128
    %v53 = vadd.s32 %v51, 256
    %v54 = vadd.s32 %v51, 384
    %vm55 = vcmp.lt.s32.totalorder %v51, 0
    %v56 = vsub.s32 0, %v51
    %v57 = vsel %vm55, %v56, %v51
    %v58 = vshrl.u32 %v57, 8
    %v59 = vand.u32 %v57, 255
    %v60 = vsub.s32 0, %v59
    %v61 = vsel %vm55, %v60, %v59
    %vm62 = vcmp.lt.s32.totalorder %v52, 0
    %v63 = vsub.s32 0, %v52
    %v64 = vsel %vm62, %v63, %v52
    %v65 = vshrl.u32 %v64, 8
    %v66 = vand.u32 %v64, 255
    %v67 = vsub.s32 0, %v66
    %v68 = vsel %vm62, %v67, %v66
    %vm69 = vcmp.lt.s32.totalorder %v53, 0
    %v70 = vsub.s32 0, %v53
    %v71 = vsel %vm69, %v70, %v53
    %v72 = vshrl.u32 %v71, 8
    %v73 = vand.u32 %v71, 255
    %v74 = vsub.s32 0, %v73
    %v75 = vsel %vm69, %v74, %v73
    %vm76 = vcmp.lt.s32.totalorder %v54, 0
    %v77 = vsub.s32 0, %v54
    %v78 = vsel %vm76, %v77, %v54
    %v79 = vshrl.u32 %v78, 8
    %v80 = vand.u32 %v78, 255
    %v81 = vsub.s32 0, %v80
    %v82 = vsel %vm76, %v81, %v80
    %vm83 = vcmp.ne.s32.totalorder %v61, 0
    %vm84 = vcmp.ne.s32.totalorder %v68, 0
    %vm85 = vcmp.ne.s32.totalorder %v75, 0
    %vm86 = vcmp.ne.s32.totalorder %v82, 0
    %vm87 = vcmp.lt.s32.totalorder %v61, 0
    %vm88 = vcmp.lt.s32.totalorder %v68, 0
    %vm89 = vcmp.lt.s32.totalorder %v75, 0
    %vm90 = vcmp.lt.s32.totalorder %v82, 0
    %vm91 = vmand %vm87, %vm83
    %vm92 = vmand %vm88, %vm84
    %vm93 = vmand %vm89, %vm85
    %vm94 = vmand %vm90, %vm86
    %v95 = vadd.s32 %v61, 256
    %v96 = vadd.s32 %v68, 256
    %v97 = vadd.s32 %v75, 256
    %v98 = vadd.s32 %v82, 256
    %v99 = vsel %vm91, %v95, %v61
    %v100 = vsel %vm92, %v96, %v68
    %v101 = vsel %vm93, %v97, %v75
    %v102 = vsel %vm94, %v98, %v82
    %vm103 = vcmp.lt.s32.totalorder %v99, 0
    %v104 = vsub.s32 0, %v99
    %v105 = vsel %vm103, %v104, %v99
    %v106 = vshrl.u32 %v105, 4
    %v107 = vand.u32 %v105, 15
    %v108 = vsub.s32 0, %v107
    %v109 = vsel %vm103, %v108, %v107
    %vm110 = vcmp.lt.s32.totalorder %v100, 0
    %v111 = vsub.s32 0, %v100
    %v112 = vsel %vm110, %v111, %v100
    %v113 = vshrl.u32 %v112, 4
    %v114 = vand.u32 %v112, 15
    %v115 = vsub.s32 0, %v114
    %v116 = vsel %vm110, %v115, %v114
    %vm117 = vcmp.lt.s32.totalorder %v101, 0
    %v118 = vsub.s32 0, %v101
    %v119 = vsel %vm117, %v118, %v101
    %v120 = vshrl.u32 %v119, 4
    %v121 = vand.u32 %v119, 15
    %v122 = vsub.s32 0, %v121
    %v123 = vsel %vm117, %v122, %v121
    %vm124 = vcmp.lt.s32.totalorder %v102, 0
    %v125 = vsub.s32 0, %v102
    %v126 = vsel %vm124, %v125, %v102
    %v127 = vshrl.u32 %v126, 4
    %v128 = vand.u32 %v126, 15
    %v129 = vsub.s32 0, %v128
    %v130 = vsel %vm124, %v129, %v128
    %vm131 = vcmp.ne.s32.totalorder %v109, 0
    %vm132 = vcmp.ne.s32.totalorder %v116, 0
    %vm133 = vcmp.ne.s32.totalorder %v123, 0
    %vm134 = vcmp.ne.s32.totalorder %v130, 0
    %vm135 = vcmp.lt.s32.totalorder %v109, 0
    %vm136 = vcmp.lt.s32.totalorder %v116, 0
    %vm137 = vcmp.lt.s32.totalorder %v123, 0
    %vm138 = vcmp.lt.s32.totalorder %v130, 0
    %vm139 = vmand %vm135, %vm131
    %vm140 = vmand %vm136, %vm132
    %vm141 = vmand %vm137, %vm133
    %vm142 = vmand %vm138, %vm134
    %v143 = vadd.s32 %v109, 16
    %v144 = vadd.s32 %v116, 16
    %v145 = vadd.s32 %v123, 16
    %v146 = vadd.s32 %v130, 16
    %v147 = vsel %vm139, %v143, %v109
    %v148 = vsel %vm140, %v144, %v116
    %v149 = vsel %vm141, %v145, %v123
    %v150 = vsel %vm142, %v146, %v130
    %vm151 = vcmp.ge.s32.totalorder %v99, 16
    %vm152 = vcmp.ge.s32.totalorder %v100, 16
    %vm153 = vcmp.ge.s32.totalorder %v101, 16
    %vm154 = vcmp.ge.s32.totalorder %v102, 16
    %vm155 = vcmp.lt.s32.totalorder %v99, 240
    %vm156 = vcmp.lt.s32.totalorder %v100, 240
    %vm157 = vcmp.lt.s32.totalorder %v101, 240
    %vm158 = vcmp.lt.s32.totalorder %v102, 240
    %vm159 = vcmp.ge.s32.totalorder %v147, 1
    %vm160 = vcmp.ge.s32.totalorder %v148, 1
    %vm161 = vcmp.ge.s32.totalorder %v149, 1
    %vm162 = vcmp.ge.s32.totalorder %v150, 1
    %vm163 = vcmp.le.s32.totalorder %v147, 14
    %vm164 = vcmp.le.s32.totalorder %v148, 14
    %vm165 = vcmp.le.s32.totalorder %v149, 14
    %vm166 = vcmp.le.s32.totalorder %v150, 14
    %v167 = vld [vmem:[#allocation2] sm:$0xf]
    %v168 = vld [vmem:[#allocation2 + $0x8] sm:$0xf]
    %v169 = vld [vmem:[#allocation2] sm:$0xf0]
    %v170 = vld [vmem:[#allocation2 + $0x8] sm:$0xf0]
    %v173 = vrot.slane %v169, 4
    %v174 = vrot.slane %v170, 4
    %v177 = vld [vmem:[#allocation5] sm:$0xff]
    %180 = vrot.lane.b32.xlu0 %v167, 17
    %v181 = vpop.permute.xlu0 %180
    %182 = vrot.lane.b32.xlu0 %v168, 17
    %v183 = vpop.permute.xlu0 %182
    %184 = vrot.lane.b32.xlu0 %v173, 17
    %v185 = vpop.permute.xlu0 %184
    %186 = vrot.lane.b32.xlu0 %v174, 17
    %v187 = vpop.permute.xlu0 %186
    %vm188 = vcmask 138240
    %v189 = vsel %vm188, %v181, %v183
    %v190 = vsel %vm188, %v183, %v185
    %v191 = vsel %vm188, %v185, %v187
    %v196 = vsel %vm188, 0.0, %v181
    %vm197 = vmand %vm151, %vm159
    %vm198 = vmand %vm152, %vm160
    %vm199 = vmand %vm153, %vm161
    %vm200 = vmand %vm154, %vm162
    %v201 = vsel %vm197, 1, 0
    %v202 = vsel %vm198, 1, 0
    %v203 = vsel %vm199, 1, 0
    %v204 = vsel %vm200, 1, 0
    %vm205 = vcmp.eq.s32.totalorder %v201, 1
    %vm206 = vcmp.eq.s32.totalorder %v202, 1
    %vm207 = vcmp.eq.s32.totalorder %v203, 1
    %vm208 = vcmp.eq.s32.totalorder %v204, 1
    %v209 = vsel %vm205, %v196, 0.0
    %v210 = vsel %vm206, %v189, 0.0
    %v211 = vsel %vm207, %v190, 0.0
    %v212 = vsel %vm208, %v191, 0.0
    %213 = vrot.lane.b32.xlu0 %v167, 16
    %v214 = vpop.permute.xlu0 %213
    %215 = vrot.lane.b32.xlu0 %v168, 16
    %v216 = vpop.permute.xlu0 %215
    %217 = vrot.lane.b32.xlu0 %v173, 16
    %v218 = vpop.permute.xlu0 %217
    %219 = vrot.lane.b32.xlu0 %v174, 16
    %v220 = vpop.permute.xlu0 %219
    %vm221 = vcmask 130048
    %v222 = vsel %vm221, %v214, %v216
    %v223 = vsel %vm221, %v216, %v218
    %v224 = vsel %vm221, %v218, %v220
    %v229 = vsel %vm221, 0.0, %v214
    %v230 = vsel %vm151, 1, 0
    %v231 = vsel %vm152, 1, 0
    %v232 = vsel %vm153, 1, 0
    %v233 = vsel %vm154, 1, 0
    %vm234 = vcmp.eq.s32.totalorder %v230, 1
    %vm235 = vcmp.eq.s32.totalorder %v231, 1
    %vm236 = vcmp.eq.s32.totalorder %v232, 1
    %vm237 = vcmp.eq.s32.totalorder %v233, 1
    %v238 = vsel %vm234, %v229, 0.0
    %v239 = vsel %vm235, %v222, 0.0
    %v240 = vsel %vm236, %v223, 0.0
    %v241 = vsel %vm237, %v224, 0.0
    %242 = vrot.lane.b32.xlu0 %v167, 15
    %v243 = vpop.permute.xlu0 %242
    %244 = vrot.lane.b32.xlu0 %v168, 15
    %v245 = vpop.permute.xlu0 %244
    %246 = vrot.lane.b32.xlu0 %v173, 15
    %v247 = vpop.permute.xlu0 %246
    %248 = vrot.lane.b32.xlu0 %v174, 15
    %v249 = vpop.permute.xlu0 %248
    %vm250 = vcmask 121856
    %v251 = vsel %vm250, %v243, %v245
    %v252 = vsel %vm250, %v245, %v247
    %v253 = vsel %vm250, %v247, %v249
    %v258 = vsel %vm250, 0.0, %v243
    %vm259 = vmand %vm151, %vm163
    %vm260 = vmand %vm152, %vm164
    %vm261 = vmand %vm153, %vm165
    %vm262 = vmand %vm154, %vm166
    %v263 = vsel %vm259, 1, 0
    %v264 = vsel %vm260, 1, 0
    %v265 = vsel %vm261, 1, 0
    %v266 = vsel %vm262, 1, 0
    %vm267 = vcmp.eq.s32.totalorder %v263, 1
    %vm268 = vcmp.eq.s32.totalorder %v264, 1
    %vm269 = vcmp.eq.s32.totalorder %v265, 1
    %vm270 = vcmp.eq.s32.totalorder %v266, 1
    %v271 = vsel %vm267, %v258, 0.0
    %v272 = vsel %vm268, %v251, 0.0
    %v273 = vsel %vm269, %v252, 0.0
    %v274 = vsel %vm270, %v253, 0.0
    %275 = vrot.lane.b32.xlu0 %v167, 1
    %v276 = vpop.permute.xlu0 %275
    %277 = vrot.lane.b32.xlu0 %v168, 1
    %v278 = vpop.permute.xlu0 %277
    %279 = vrot.lane.b32.xlu0 %v173, 1
    %v280 = vpop.permute.xlu0 %279
    %281 = vrot.lane.b32.xlu0 %v174, 1
    %v282 = vpop.permute.xlu0 %281
    %vm283 = vcmask 7168
    %v284 = vsel %vm283, %v276, %v278
    %v285 = vsel %vm283, %v278, %v280
    %v286 = vsel %vm283, %v280, %v282
    %v291 = vsel %vm283, 0.0, %v276
    %v292 = vsel %vm159, 1, 0
    %v293 = vsel %vm160, 1, 0
    %v294 = vsel %vm161, 1, 0
    %v295 = vsel %vm162, 1, 0
    %vm296 = vcmp.eq.s32.totalorder %v292, 1
    %vm297 = vcmp.eq.s32.totalorder %v293, 1
    %vm298 = vcmp.eq.s32.totalorder %v294, 1
    %vm299 = vcmp.eq.s32.totalorder %v295, 1
    %v300 = vsel %vm296, %v291, 0.0
    %v301 = vsel %vm297, %v284, 0.0
    %v302 = vsel %vm298, %v285, 0.0
    %v303 = vsel %vm299, %v286, 0.0
    %304 = vrot.lane.b32.xlu0 %v167, 127
    %v305 = vpop.permute.xlu0 %304
    %306 = vrot.lane.b32.xlu0 %v168, 127
    %v307 = vpop.permute.xlu0 %306
    %308 = vrot.lane.b32.xlu0 %v173, 127
    %v309 = vpop.permute.xlu0 %308
    %310 = vrot.lane.b32.xlu0 %v174, 127
    %v311 = vpop.permute.xlu0 %310
    %vm312 = vcmask 1039360
    %v313 = vsel %vm312, %v305, %v307
    %v314 = vsel %vm312, %v307, %v309
    %v315 = vsel %vm312, %v309, %v311
    %v320 = vsel %vm312, %v311, 0.0
    %v321 = vsel %vm163, 1, 0
    %v322 = vsel %vm164, 1, 0
    %v323 = vsel %vm165, 1, 0
    %v324 = vsel %vm166, 1, 0
    %vm325 = vcmp.eq.s32.totalorder %v321, 1
    %vm326 = vcmp.eq.s32.totalorder %v322, 1
    %vm327 = vcmp.eq.s32.totalorder %v323, 1
    %vm328 = vcmp.eq.s32.totalorder %v324, 1
    %v329 = vsel %vm325, %v313, 0.0
    %v330 = vsel %vm326, %v314, 0.0
    %v331 = vsel %vm327, %v315, 0.0
    %v332 = vsel %vm328, %v320, 0.0
    %333 = vrot.lane.b32.xlu0 %v167, 113
    %v334 = vpop.permute.xlu0 %333
    %335 = vrot.lane.b32.xlu0 %v168, 113
    %v336 = vpop.permute.xlu0 %335
    %337 = vrot.lane.b32.xlu0 %v173, 113
    %v338 = vpop.permute.xlu0 %337
    %339 = vrot.lane.b32.xlu0 %v174, 113
    %v340 = vpop.permute.xlu0 %339
    %vm341 = vcmask 924672
    %v342 = vsel %vm341, %v334, %v336
    %v343 = vsel %vm341, %v336, %v338
    %v344 = vsel %vm341, %v338, %v340
    %v349 = vsel %vm341, %v340, 0.0
    %vm350 = vmand %vm155, %vm159
    %vm351 = vmand %vm156, %vm160
    %vm352 = vmand %vm157, %vm161
    %vm353 = vmand %vm158, %vm162
    %v354 = vsel %vm350, 1, 0
    %v355 = vsel %vm351, 1, 0
    %v356 = vsel %vm352, 1, 0
    %v357 = vsel %vm353, 1, 0
    %vm358 = vcmp.eq.s32.totalorder %v354, 1
    %vm359 = vcmp.eq.s32.totalorder %v355, 1
    %vm360 = vcmp.eq.s32.totalorder %v356, 1
    %vm361 = vcmp.eq.s32.totalorder %v357, 1
    %v362 = vsel %vm358, %v342, 0.0
    %v363 = vsel %vm359, %v343, 0.0
    %v364 = vsel %vm360, %v344, 0.0
    %v365 = vsel %vm361, %v349, 0.0
    %366 = vrot.lane.b32.xlu0 %v167, 112
    %v367 = vpop.permute.xlu0 %366
    %368 = vrot.lane.b32.xlu0 %v168, 112
    %v369 = vpop.permute.xlu0 %368
    %370 = vrot.lane.b32.xlu0 %v173, 112
    %v371 = vpop.permute.xlu0 %370
    %372 = vrot.lane.b32.xlu0 %v174, 112
    %v373 = vpop.permute.xlu0 %372
    %vm374 = vcmask 916480
    %v375 = vsel %vm374, %v367, %v369
    %v376 = vsel %vm374, %v369, %v371
    %v377 = vsel %vm374, %v371, %v373
    %v382 = vsel %vm374, %v373, 0.0
    %v383 = vsel %vm155, 1, 0
    %v384 = vsel %vm156, 1, 0
    %v385 = vsel %vm157, 1, 0
    %v386 = vsel %vm158, 1, 0
    %vm387 = vcmp.eq.s32.totalorder %v383, 1
    %vm388 = vcmp.eq.s32.totalorder %v384, 1
    %vm389 = vcmp.eq.s32.totalorder %v385, 1
    %vm390 = vcmp.eq.s32.totalorder %v386, 1
    %v391 = vsel %vm387, %v375, 0.0
    %v392 = vsel %vm388, %v376, 0.0
    %v393 = vsel %vm389, %v377, 0.0
    %v394 = vsel %vm390, %v382, 0.0
    %395 = vrot.lane.b32.xlu0 %v167, 111
    %v396 = vpop.permute.xlu0 %395
    %397 = vrot.lane.b32.xlu0 %v168, 111
    %v398 = vpop.permute.xlu0 %397
    %399 = vrot.lane.b32.xlu0 %v173, 111
    %v400 = vpop.permute.xlu0 %399
    %401 = vrot.lane.b32.xlu0 %v174, 111
    %v402 = vpop.permute.xlu0 %401
    %vm403 = vcmask 908288
    %v404 = vsel %vm403, %v396, %v398
    %v405 = vsel %vm403, %v398, %v400
    %v406 = vsel %vm403, %v400, %v402
    %v411 = vsel %vm403, %v402, 0.0
    %vm412 = vmand %vm155, %vm163
    %vm413 = vmand %vm156, %vm164
    %vm414 = vmand %vm157, %vm165
    %vm415 = vmand %vm158, %vm166
    %v416 = vsel %vm412, 1, 0
    %v417 = vsel %vm413, 1, 0
    %v418 = vsel %vm414, 1, 0
    %v419 = vsel %vm415, 1, 0
    %vm420 = vcmp.eq.s32.totalorder %v416, 1
    %vm421 = vcmp.eq.s32.totalorder %v417, 1
    %vm422 = vcmp.eq.s32.totalorder %v418, 1
    %vm423 = vcmp.eq.s32.totalorder %v419, 1
    %v424 = vsel %vm420, %v404, 0.0
    %v425 = vsel %vm421, %v405, 0.0
    %v426 = vsel %vm422, %v406, 0.0
    %v427 = vsel %vm423, %v411, 0.0
    %v428 = vlaneseq
    %v429 = vshrl.u32 %v428, 7
    %vm430 = vcmp.eq.s32.totalorder %v429, 0
    %v431 = vsel %vm430, 1, 0
    %v432 = vcvt.s32.f32 %v431
    %v437 = vrot.slane %v238, 4
    %v438 = vrot.slane %v239, 4
    %v439 = vrot.slane %v240, 4
    %v440 = vrot.slane %v241, 4
    %v449 = vrot.slane %v300, 4
    %v450 = vrot.slane %v301, 4
    %v451 = vrot.slane %v302, 4
    %v452 = vrot.slane %v303, 4
    %v461 = vrot.slane %v329, 4
    %v462 = vrot.slane %v330, 4
    %v463 = vrot.slane %v331, 4
    %v464 = vrot.slane %v332, 4
    %v473 = vrot.slane %v391, 4
    %v474 = vrot.slane %v392, 4
    %v475 = vrot.slane %v393, 4
    %v476 = vrot.slane %v394, 4
    %v482 = vrot.slane %v432, 4
    %vm484 = vcmask 1043456
    %v485 = vsel %vm484, %v209, %v437
    %v486 = vsel %vm484, %v210, %v438
    %v487 = vsel %vm484, %v211, %v439
    %v488 = vsel %vm484, %v212, %v440
    %v489 = vsel %vm484, %v271, %v449
    %v490 = vsel %vm484, %v272, %v450
    %v491 = vsel %vm484, %v273, %v451
    %v492 = vsel %vm484, %v274, %v452
    %v493 = vsel %vm484, %v167, %v461
    %v494 = vsel %vm484, %v168, %v462
    %v495 = vsel %vm484, %v173, %v463
    %v496 = vsel %vm484, %v174, %v464
    %v497 = vsel %vm484, %v362, %v473
    %v498 = vsel %vm484, %v363, %v474
    %v499 = vsel %vm484, %v364, %v475
    %v500 = vsel %vm484, %v365, %v476
    %v501 = vsel %vm484, %v424, %v482
    %v502 = vsel %vm484, %v425, %v482
    %v503 = vsel %vm484, %v426, %v482
    %v504 = vsel %vm484, %v427, %v482
    %vm505 = vcmask 326656
    %v507 = vsel %vm505, %v177, 0
    %509 = vmatprep.subr.mxu0 0.0
    %510 = vmatpush1.msra.mxu0 0.0
    %511 = vmatprep.subr.mxu0 0.0
    %512 = vmatpush1.msra.mxu0 0.0
    %513 = vmatprep.subr.mxu0 0.0
    %514 = vmatpush1.msra.mxu0 0.0
    %515 = vmatprep.subr.mxu0 0.0
    %516 = vmatpush1.msra.mxu0 0.0
    %517 = vmatprep.subr.mxu0 0.0
    %518 = vmatpush1.msra.mxu0 0.0
    %519 = vmatprep.subr.mxu0 0.0
    %520 = vmatpush1.msra.mxu0 0.0
    %521 = vmatprep.subr.mxu0 0.0
    %522 = vmatpush1.msra.mxu0 0.0
    %523 = vmatprep.subr.mxu0 0.0
    %524 = vmatpush1.msra.mxu0 0.0
    %525 = vmatprep.subr.mxu0 0.0
    %526 = vmatpush1.msra.mxu0 0.0
    %527 = vmatprep.subr.mxu0 0.0
    %528 = vmatpush1.msra.mxu0 0.0
    %529 = vmatprep.subr.mxu0 0.0
    %530 = vmatpush1.msra.mxu0 0.0
    %531 = vmatprep.subr.mxu0 %v502
    %532 = vmatpush1.msra.mxu0 %v501
    %533 = vmatprep.subr.mxu0 %v498
    %534 = vmatpush1.msra.mxu0 %v497
    %535 = vmatprep.subr.mxu0 %v494
    %536 = vmatpush1.msra.mxu0 %v493
    %537 = vmatprep.subr.mxu0 %v490
    %538 = vmatpush1.msra.mxu0 %v489
    %539 = vmatprep.subr.mxu0 %v486
    %540 = vmatpush1.msra.mxu0 %v485
    %541 = vmatprep.subr.mxu0 0.0
    %542 = vmatpush2.msra.mxu0 0.0
    %543 = vmatprep.subr.mxu0 0.0
    %544 = vmatpush2.msra.mxu0 0.0
    %545 = vmatprep.subr.mxu0 0.0
    %546 = vmatpush2.msra.mxu0 0.0
    %547 = vmatprep.subr.mxu0 0.0
    %548 = vmatpush2.msra.mxu0 0.0
    %549 = vmatprep.subr.mxu0 0.0
    %550 = vmatpush2.msra.mxu0 0.0
    %551 = vmatprep.subr.mxu0 0.0
    %552 = vmatpush2.msra.mxu0 0.0
    %553 = vmatprep.subr.mxu0 0.0
    %554 = vmatpush2.msra.mxu0 0.0
    %555 = vmatprep.subr.mxu0 0.0
    %556 = vmatpush2.msra.mxu0 0.0
    %557 = vmatprep.subr.mxu0 0.0
    %558 = vmatpush2.msra.mxu0 0.0
    %559 = vmatprep.subr.mxu0 0.0
    %560 = vmatpush2.msra.mxu0 0.0
    %561 = vmatprep.subr.mxu0 0.0
    %562 = vmatpush2.msra.mxu0 0.0
    %563 = vmatprep.subr.mxu0 0.0
    %564 = vmatpush2.msra.mxu0 0.0
    %565 = vmatprep.subr.mxu0 0.0
    %566 = vmatpush2.msra.mxu0 0.0
    %567 = vmatprep.subr.mxu0 0.0
    %568 = vmatpush2.msra.mxu0 0.0
    %569 = vmatprep.subr.mxu0 0.0
    %570 = vmatpush2.msra.mxu0 0.0
    %571 = vmatprep.subr.mxu0 0.0
    %572 = vmatpush2.msra.mxu0 0.0
    %573 = vmatprep.mubr.f32.mxu0 0.0
    %574 = vmatmul.mubr.f32.gmra.mxu0 %v507
    %v575 = vpop.f32.mrf.mxu0
    %v576 = vadd.f32 0.0, %v575
    %v577 = vpop.f32.mrf.mxu0
    %v578 = vadd.f32 0.0, %v577
    %579 = vdwg.mxu0
    %580 = vmatprep.subr.mxu0 0.0
    %581 = vmatpush1.msra.mxu0 0.0
    %582 = vmatprep.subr.mxu0 0.0
    %583 = vmatpush1.msra.mxu0 0.0
    %584 = vmatprep.subr.mxu0 0.0
    %585 = vmatpush1.msra.mxu0 0.0
    %586 = vmatprep.subr.mxu0 0.0
    %587 = vmatpush1.msra.mxu0 0.0
    %588 = vmatprep.subr.mxu0 0.0
    %589 = vmatpush1.msra.mxu0 0.0
    %590 = vmatprep.subr.mxu0 0.0
    %591 = vmatpush1.msra.mxu0 0.0
    %592 = vmatprep.subr.mxu0 0.0
    %593 = vmatpush1.msra.mxu0 0.0
    %594 = vmatprep.subr.mxu0 0.0
    %595 = vmatpush1.msra.mxu0 0.0
    %596 = vmatprep.subr.mxu0 0.0
    %597 = vmatpush1.msra.mxu0 0.0
    %598 = vmatprep.subr.mxu0 0.0
    %599 = vmatpush1.msra.mxu0 0.0
    %600 = vmatprep.subr.mxu0 0.0
    %601 = vmatpush1.msra.mxu0 0.0
    %602 = vmatprep.subr.mxu0 %v504
    %603 = vmatpush1.msra.mxu0 %v503
    %604 = vmatprep.subr.mxu0 %v500
    %605 = vmatpush1.msra.mxu0 %v499
    %606 = vmatprep.subr.mxu0 %v496
    %607 = vmatpush1.msra.mxu0 %v495
    %608 = vmatprep.subr.mxu0 %v492
    %609 = vmatpush1.msra.mxu0 %v491
    %610 = vmatprep.subr.mxu0 %v488
    %611 = vmatpush1.msra.mxu0 %v487
    %612 = vmatprep.subr.mxu0 0.0
    %613 = vmatpush2.msra.mxu0 0.0
    %614 = vmatprep.subr.mxu0 0.0
    %615 = vmatpush2.msra.mxu0 0.0
    %616 = vmatprep.subr.mxu0 0.0
    %617 = vmatpush2.msra.mxu0 0.0
    %618 = vmatprep.subr.mxu0 0.0
    %619 = vmatpush2.msra.mxu0 0.0
    %620 = vmatprep.subr.mxu0 0.0
    %621 = vmatpush2.msra.mxu0 0.0
    %622 = vmatprep.subr.mxu0 0.0
    %623 = vmatpush2.msra.mxu0 0.0
    %624 = vmatprep.subr.mxu0 0.0
    %625 = vmatpush2.msra.mxu0 0.0
    %626 = vmatprep.subr.mxu0 0.0
    %627 = vmatpush2.msra.mxu0 0.0
    %628 = vmatprep.subr.mxu0 0.0
    %629 = vmatpush2.msra.mxu0 0.0
    %630 = vmatprep.subr.mxu0 0.0
    %631 = vmatpush2.msra.mxu0 0.0
    %632 = vmatprep.subr.mxu0 0.0
    %633 = vmatpush2.msra.mxu0 0.0
    %634 = vmatprep.subr.mxu0 0.0
    %635 = vmatpush2.msra.mxu0 0.0
    %636 = vmatprep.subr.mxu0 0.0
    %637 = vmatpush2.msra.mxu0 0.0
    %638 = vmatprep.subr.mxu0 0.0
    %639 = vmatpush2.msra.mxu0 0.0
    %640 = vmatprep.subr.mxu0 0.0
    %641 = vmatpush2.msra.mxu0 0.0
    %642 = vmatprep.subr.mxu0 0.0
    %643 = vmatpush2.msra.mxu0 0.0
    %644 = vmatprep.mubr.f32.mxu0 0.0
    %645 = vmatmul.mubr.f32.gmra.mxu0 %v507
    %v646 = vpop.f32.mrf.mxu0
    %v647 = vadd.f32 0.0, %v646
    %v648 = vpop.f32.mrf.mxu0
    %v649 = vadd.f32 0.0, %v648
    %650 = vdwg.mxu0
    %v651 = vmax.f32 %v576, 0.0
    %v652 = vmax.f32 %v578, 0.0
    %v653 = vmax.f32 %v647, 0.0
    %v654 = vmax.f32 %v649, 0.0
    %v655 = vld [vmem:[#allocation7] sm:$0xf]
    %660 = vrot.lane.b32.xlu0 %v651, 17
    %v661 = vpop.permute.xlu0 %660
    %662 = vrot.lane.b32.xlu0 %v652, 17
    %v663 = vpop.permute.xlu0 %662
    %664 = vrot.lane.b32.xlu0 %v653, 17
    %v665 = vpop.permute.xlu0 %664
    %666 = vrot.lane.b32.xlu0 %v654, 17
    %v667 = vpop.permute.xlu0 %666
    %v668 = vsel %vm188, %v661, %v663
    %v669 = vsel %vm188, %v663, %v665
    %v670 = vsel %vm188, %v665, %v667
    %v675 = vsel %vm188, 0.0, %v661
    %v676 = vsel %vm205, %v675, 0.0
    %v677 = vsel %vm206, %v668, 0.0
    %v678 = vsel %vm207, %v669, 0.0
    %v679 = vsel %vm208, %v670, 0.0
    %680 = vrot.lane.b32.xlu0 %v651, 16
    %v681 = vpop.permute.xlu0 %680
    %682 = vrot.lane.b32.xlu0 %v652, 16
    %v683 = vpop.permute.xlu0 %682
    %684 = vrot.lane.b32.xlu0 %v653, 16
    %v685 = vpop.permute.xlu0 %684
    %686 = vrot.lane.b32.xlu0 %v654, 16
    %v687 = vpop.permute.xlu0 %686
    %v688 = vsel %vm221, %v681, %v683
    %v689 = vsel %vm221, %v683, %v685
    %v690 = vsel %vm221, %v685, %v687
    %v695 = vsel %vm221, 0.0, %v681
    %v696 = vsel %vm234, %v695, 0.0
    %v697 = vsel %vm235, %v688, 0.0
    %v698 = vsel %vm236, %v689, 0.0
    %v699 = vsel %vm237, %v690, 0.0
    %700 = vrot.lane.b32.xlu0 %v651, 15
    %v701 = vpop.permute.xlu0 %700
    %702 = vrot.lane.b32.xlu0 %v652, 15
    %v703 = vpop.permute.xlu0 %702
    %704 = vrot.lane.b32.xlu0 %v653, 15
    %v705 = vpop.permute.xlu0 %704
    %706 = vrot.lane.b32.xlu0 %v654, 15
    %v707 = vpop.permute.xlu0 %706
    %v708 = vsel %vm250, %v701, %v703
    %v709 = vsel %vm250, %v703, %v705
    %v710 = vsel %vm250, %v705, %v707
    %v715 = vsel %vm250, 0.0, %v701
    %v716 = vsel %vm267, %v715, 0.0
    %v717 = vsel %vm268, %v708, 0.0
    %v718 = vsel %vm269, %v709, 0.0
    %v719 = vsel %vm270, %v710, 0.0
    %720 = vrot.lane.b32.xlu0 %v651, 1
    %v721 = vpop.permute.xlu0 %720
    %722 = vrot.lane.b32.xlu0 %v652, 1
    %v723 = vpop.permute.xlu0 %722
    %724 = vrot.lane.b32.xlu0 %v653, 1
    %v725 = vpop.permute.xlu0 %724
    %726 = vrot.lane.b32.xlu0 %v654, 1
    %v727 = vpop.permute.xlu0 %726
    %v728 = vsel %vm283, %v721, %v723
    %v729 = vsel %vm283, %v723, %v725
    %v730 = vsel %vm283, %v725, %v727
    %v735 = vsel %vm283, 0.0, %v721
    %v736 = vsel %vm296, %v735, 0.0
    %v737 = vsel %vm297, %v728, 0.0
    %v738 = vsel %vm298, %v729, 0.0
    %v739 = vsel %vm299, %v730, 0.0
    %740 = vrot.lane.b32.xlu0 %v651, 127
    %v741 = vpop.permute.xlu0 %740
    %742 = vrot.lane.b32.xlu0 %v652, 127
    %v743 = vpop.permute.xlu0 %742
    %744 = vrot.lane.b32.xlu0 %v653, 127
    %v745 = vpop.permute.xlu0 %744
    %746 = vrot.lane.b32.xlu0 %v654, 127
    %v747 = vpop.permute.xlu0 %746
    %v748 = vsel %vm312, %v741, %v743
    %v749 = vsel %vm312, %v743, %v745
    %v750 = vsel %vm312, %v745, %v747
    %v755 = vsel %vm312, %v747, 0.0
    %v756 = vsel %vm325, %v748, 0.0
    %v757 = vsel %vm326, %v749, 0.0
    %v758 = vsel %vm327, %v750, 0.0
    %v759 = vsel %vm328, %v755, 0.0
    %760 = vrot.lane.b32.xlu0 %v651, 113
    %v761 = vpop.permute.xlu0 %760
    %762 = vrot.lane.b32.xlu0 %v652, 113
    %v763 = vpop.permute.xlu0 %762
    %764 = vrot.lane.b32.xlu0 %v653, 113
    %v765 = vpop.permute.xlu0 %764
    %766 = vrot.lane.b32.xlu0 %v654, 113
    %v767 = vpop.permute.xlu0 %766
    %v768 = vsel %vm341, %v761, %v763
    %v769 = vsel %vm341, %v763, %v765
    %v770 = vsel %vm341, %v765, %v767
    %v775 = vsel %vm341, %v767, 0.0
    %v776 = vsel %vm358, %v768, 0.0
    %v777 = vsel %vm359, %v769, 0.0
    %v778 = vsel %vm360, %v770, 0.0
    %v779 = vsel %vm361, %v775, 0.0
    %780 = vrot.lane.b32.xlu0 %v651, 112
    %v781 = vpop.permute.xlu0 %780
    %782 = vrot.lane.b32.xlu0 %v652, 112
    %v783 = vpop.permute.xlu0 %782
    %784 = vrot.lane.b32.xlu0 %v653, 112
    %v785 = vpop.permute.xlu0 %784
    %786 = vrot.lane.b32.xlu0 %v654, 112
    %v787 = vpop.permute.xlu0 %786
    %v788 = vsel %vm374, %v781, %v783
    %v789 = vsel %vm374, %v783, %v785
    %v790 = vsel %vm374, %v785, %v787
    %v795 = vsel %vm374, %v787, 0.0
    %v796 = vsel %vm387, %v788, 0.0
    %v797 = vsel %vm388, %v789, 0.0
    %v798 = vsel %vm389, %v790, 0.0
    %v799 = vsel %vm390, %v795, 0.0
    %800 = vrot.lane.b32.xlu0 %v651, 111
    %v801 = vpop.permute.xlu0 %800
    %802 = vrot.lane.b32.xlu0 %v652, 111
    %v803 = vpop.permute.xlu0 %802
    %804 = vrot.lane.b32.xlu0 %v653, 111
    %v805 = vpop.permute.xlu0 %804
    %806 = vrot.lane.b32.xlu0 %v654, 111
    %v807 = vpop.permute.xlu0 %806
    %v808 = vsel %vm403, %v801, %v803
    %v809 = vsel %vm403, %v803, %v805
    %v810 = vsel %vm403, %v805, %v807
    %v815 = vsel %vm403, %v807, 0.0
    %v816 = vsel %vm420, %v808, 0.0
    %v817 = vsel %vm421, %v809, 0.0
    %v818 = vsel %vm422, %v810, 0.0
    %v819 = vsel %vm423, %v815, 0.0
    %vm820 = vcmask 654336
    %v822 = vsel %vm820, %v655, 0
    %824 = vmatprep.subr.mxu0 0.0
    %825 = vmatpush1.msra.mxu0 0.0
    %826 = vmatprep.subr.mxu0 0.0
    %827 = vmatpush1.msra.mxu0 0.0
    %828 = vmatprep.subr.mxu0 0.0
    %829 = vmatpush1.msra.mxu0 0.0
    %830 = vmatprep.subr.mxu0 0.0
    %831 = vmatpush1.msra.mxu0 0.0
    %832 = vmatprep.subr.mxu0 0.0
    %833 = vmatpush1.msra.mxu0 0.0
    %834 = vmatprep.subr.mxu0 0.0
    %835 = vmatpush1.msra.mxu0 0.0
    %836 = vmatprep.subr.mxu0 %v432
    %837 = vmatpush1.msra.mxu0 %v432
    %838 = vmatprep.subr.mxu0 %v817
    %839 = vmatpush1.msra.mxu0 %v816
    %840 = vmatprep.subr.mxu0 %v797
    %841 = vmatpush1.msra.mxu0 %v796
    %842 = vmatprep.subr.mxu0 %v777
    %843 = vmatpush1.msra.mxu0 %v776
    %844 = vmatprep.subr.mxu0 %v757
    %845 = vmatpush1.msra.mxu0 %v756
    %846 = vmatprep.subr.mxu0 %v652
    %847 = vmatpush1.msra.mxu0 %v651
    %848 = vmatprep.subr.mxu0 %v737
    %849 = vmatpush1.msra.mxu0 %v736
    %850 = vmatprep.subr.mxu0 %v717
    %851 = vmatpush1.msra.mxu0 %v716
    %852 = vmatprep.subr.mxu0 %v697
    %853 = vmatpush1.msra.mxu0 %v696
    %854 = vmatprep.subr.mxu0 %v677
    %855 = vmatpush1.msra.mxu0 %v676
    %856 = vmatprep.subr.mxu0 0.0
    %857 = vmatpush2.msra.mxu0 0.0
    %858 = vmatprep.subr.mxu0 0.0
    %859 = vmatpush2.msra.mxu0 0.0
    %860 = vmatprep.subr.mxu0 0.0
    %861 = vmatpush2.msra.mxu0 0.0
    %862 = vmatprep.subr.mxu0 0.0
    %863 = vmatpush2.msra.mxu0 0.0
    %864 = vmatprep.subr.mxu0 0.0
    %865 = vmatpush2.msra.mxu0 0.0
    %866 = vmatprep.subr.mxu0 0.0
    %867 = vmatpush2.msra.mxu0 0.0
    %868 = vmatprep.subr.mxu0 0.0
    %869 = vmatpush2.msra.mxu0 0.0
    %870 = vmatprep.subr.mxu0 0.0
    %871 = vmatpush2.msra.mxu0 0.0
    %872 = vmatprep.subr.mxu0 0.0
    %873 = vmatpush2.msra.mxu0 0.0
    %874 = vmatprep.subr.mxu0 0.0
    %875 = vmatpush2.msra.mxu0 0.0
    %876 = vmatprep.subr.mxu0 0.0
    %877 = vmatpush2.msra.mxu0 0.0
    %878 = vmatprep.subr.mxu0 0.0
    %879 = vmatpush2.msra.mxu0 0.0
    %880 = vmatprep.subr.mxu0 0.0
    %881 = vmatpush2.msra.mxu0 0.0
    %882 = vmatprep.subr.mxu0 0.0
    %883 = vmatpush2.msra.mxu0 0.0
    %884 = vmatprep.subr.mxu0 0.0
    %885 = vmatpush2.msra.mxu0 0.0
    %886 = vmatprep.subr.mxu0 0.0
    %887 = vmatpush2.msra.mxu0 0.0
    %888 = vmatprep.mubr.f32.mxu0 0.0
    %889 = vmatmul.mubr.f32.gmra.mxu0 %v822
    %v890 = vpop.f32.mrf.mxu0
    %v891 = vadd.f32 0.0, %v890
    %v892 = vpop.f32.mrf.mxu0
    %v893 = vadd.f32 0.0, %v892
    %894 = vdwg.mxu0
    %895 = vmatprep.subr.mxu0 0.0
    %896 = vmatpush1.msra.mxu0 0.0
    %897 = vmatprep.subr.mxu0 0.0
    %898 = vmatpush1.msra.mxu0 0.0
    %899 = vmatprep.subr.mxu0 0.0
    %900 = vmatpush1.msra.mxu0 0.0
    %901 = vmatprep.subr.mxu0 0.0
    %902 = vmatpush1.msra.mxu0 0.0
    %903 = vmatprep.subr.mxu0 0.0
    %904 = vmatpush1.msra.mxu0 0.0
    %905 = vmatprep.subr.mxu0 0.0
    %906 = vmatpush1.msra.mxu0 0.0
    %907 = vmatprep.subr.mxu0 %v432
    %908 = vmatpush1.msra.mxu0 %v432
    %909 = vmatprep.subr.mxu0 %v819
    %910 = vmatpush1.msra.mxu0 %v818
    %911 = vmatprep.subr.mxu0 %v799
    %912 = vmatpush1.msra.mxu0 %v798
    %913 = vmatprep.subr.mxu0 %v779
    %914 = vmatpush1.msra.mxu0 %v778
    %915 = vmatprep.subr.mxu0 %v759
    %916 = vmatpush1.msra.mxu0 %v758
    %917 = vmatprep.subr.mxu0 %v654
    %918 = vmatpush1.msra.mxu0 %v653
    %919 = vmatprep.subr.mxu0 %v739
    %920 = vmatpush1.msra.mxu0 %v738
    %921 = vmatprep.subr.mxu0 %v719
    %922 = vmatpush1.msra.mxu0 %v718
    %923 = vmatprep.subr.mxu0 %v699
    %924 = vmatpush1.msra.mxu0 %v698
    %925 = vmatprep.subr.mxu0 %v679
    %926 = vmatpush1.msra.mxu0 %v678
    %927 = vmatprep.subr.mxu0 0.0
    %928 = vmatpush2.msra.mxu0 0.0
    %929 = vmatprep.subr.mxu0 0.0
    %930 = vmatpush2.msra.mxu0 0.0
    %931 = vmatprep.subr.mxu0 0.0
    %932 = vmatpush2.msra.mxu0 0.0
    %933 = vmatprep.subr.mxu0 0.0
    %934 = vmatpush2.msra.mxu0 0.0
    %935 = vmatprep.subr.mxu0 0.0
    %936 = vmatpush2.msra.mxu0 0.0
    %937 = vmatprep.subr.mxu0 0.0
    %938 = vmatpush2.msra.mxu0 0.0
    %939 = vmatprep.subr.mxu0 0.0
    %940 = vmatpush2.msra.mxu0 0.0
    %941 = vmatprep.subr.mxu0 0.0
    %942 = vmatpush2.msra.mxu0 0.0
    %943 = vmatprep.subr.mxu0 0.0
    %944 = vmatpush2.msra.mxu0 0.0
    %945 = vmatprep.subr.mxu0 0.0
    %946 = vmatpush2.msra.mxu0 0.0
    %947 = vmatprep.subr.mxu0 0.0
    %948 = vmatpush2.msra.mxu0 0.0
    %949 = vmatprep.subr.mxu0 0.0
    %950 = vmatpush2.msra.mxu0 0.0
    %951 = vmatprep.subr.mxu0 0.0
    %952 = vmatpush2.msra.mxu0 0.0
    %953 = vmatprep.subr.mxu0 0.0
    %954 = vmatpush2.msra.mxu0 0.0
    %955 = vmatprep.subr.mxu0 0.0
    %956 = vmatpush2.msra.mxu0 0.0
    %957 = vmatprep.subr.mxu0 0.0
    %958 = vmatpush2.msra.mxu0 0.0
    %959 = vmatprep.mubr.f32.mxu0 0.0
    %960 = vmatmul.mubr.f32.gmra.mxu0 %v822
    %v961 = vpop.f32.mrf.mxu0
    %v962 = vadd.f32 0.0, %v961
    %v963 = vpop.f32.mrf.mxu0
    %v964 = vadd.f32 0.0, %v963
    %965 = vdwg.mxu0
    %v966 = vmax.f32 %v891, 0.0
    %v967 = vmax.f32 %v893, 0.0
    %v968 = vmax.f32 %v962, 0.0
    %v969 = vmax.f32 %v964, 0.0
    %v972 = vrot.slane %v968, 4
    %v973 = vrot.slane %v969, 4
    %v976 = vsel %vm484, %v966, %v972
    %v977 = vsel %vm484, %v967, %v973
    %978 = vst [vmem:[#allocation8] sm:$0xff] %v976
    %979 = vst [vmem:[#allocation8 + $0x8] sm:$0xff] %v977
    // Predicated region
    $region26: #{tpu_custom_call.1} parent=1 // pred_check
      _
    $region27: #{tpu_custom_call.1} parent=1 // pred_check_branch
      %981 = sbr.rel (0) target = $region29
    $region28: #{tpu_custom_call.1} parent=1 // pred_region
      %s983 = ssub.s32 256, 256
      %984 = vsyncadd [#allocation4], %s983
      %s986 = sshll.u32 [#allocation8], 4
      %s987 = int_to_ptr.vmem [resolvable:$true] %s986
      %989 = dma.vmem_to_hbm [thread:$0]  %s987, 256, %s3, [#allocation4]
    $region29: #{tpu_custom_call.1} parent=1 // pred_fallthru
      _
    // Predicated region
    $region30: #{tpu_custom_call.1} parent=1 // pred_check
      _
    $region31: #{tpu_custom_call.1} parent=1 // pred_check_branch
      %991 = sbr.rel (0) target = $region33
    $region32: #{tpu_custom_call.1} parent=1 // pred_region
      %992 = dma.done [#allocation4], 256
    $region33: #{tpu_custom_call.1} parent=1 // pred_fallthru
      _
    %993 = vsyncpa [#allocation3], 1
    %994 = vsyncpa [#allocation6], 1
    %995 = vsyncpa [#allocation4], 1

</llo_original>
